<compile_context>
chip_gen: v6e
topology: v6e:2x2x1
jax: 0.10.0
libtpu: 0.0.40
codegen_flags: <defaults>
</compile_context>

<pallas_src>
import numpy as np

import jax
import jax.numpy as jnp
from jax.experimental import pallas as pl
from jax.experimental.pallas import tpu as pltpu

_VMEM_LIMIT = 48 * 1024 * 1024  # < v7x physical 64 MiB, > v5e default 16 MiB


def _round_up(x, m):
    return (x + m - 1) // m * m


def _pick_lane_tile(num_cols_128):
    """Largest 128-multiple tile dividing the padded lane extent while keeping
    >=2 grid blocks when possible (so v7x's two TensorCores both get work)."""
    k = num_cols_128
    for d in (4, 2, 1):
        if k % d == 0 and k // d >= 2:
            return 128 * d
    return 128 * k  # small problem: single block


# ----------------------------------------------------------------------------
# Shared (non-individual) mode.
# out[o, n] = sum_t W[o, t] * X[t, n] + b[o],  X is the batch-fused (T, B*F).
# ----------------------------------------------------------------------------
def _dlinear_shared_kernel(ws_ref, bs_ref, wt_ref, bt_ref,
                           xs_ref, xt_ref, so_ref, to_ref):
    so_ref[...] = (
        jnp.dot(ws_ref[...], xs_ref[...], preferred_element_type=jnp.float32)
        + bs_ref[...]
    ).astype(so_ref.dtype)
    to_ref[...] = (
        jnp.dot(wt_ref[...], xt_ref[...], preferred_element_type=jnp.float32)
        + bt_ref[...]
    ).astype(to_ref.dtype)


def dlinear_shared(seasonal_init, trend_init, w_seasonal, b_seasonal,
                   w_trend, b_trend, compute_dtype=None):
    """seasonal_init/trend_init: [B, T, F]; w_*: (T_out, T_in); b_*: (T,)."""
    B, T, F = seasonal_init.shape
    out_dtype = seasonal_init.dtype
    N = B * F

    # Layout plumbing: [B, T, F] -> lane-dense (T, B*F), padded to 128 lanes.
    xs = jnp.transpose(seasonal_init, (1, 0, 2)).reshape(T, N)
    xt = jnp.transpose(trend_init, (1, 0, 2)).reshape(T, N)
    Np = _round_up(N, 128)
    if Np != N:
        pad = ((0, 0), (0, Np - N))
        xs = jnp.pad(xs, pad)
        xt = jnp.pad(xt, pad)

    tn = _pick_lane_tile(Np // 128)
    nb = Np // tn

    ws, wt = w_seasonal, w_trend
    bs = b_seasonal.reshape(T, 1).astype(jnp.float32)
    bt = b_trend.reshape(T, 1).astype(jnp.float32)
    if compute_dtype is not None:  # optional bf16 MXU fast path
        xs, xt = xs.astype(compute_dtype), xt.astype(compute_dtype)
        ws, wt = ws.astype(compute_dtype), wt.astype(compute_dtype)

    w_spec = pl.BlockSpec((T, T), lambda j: (0, 0))   # constant -> staged once
    b_spec = pl.BlockSpec((T, 1), lambda j: (0, 0))
    x_spec = pl.BlockSpec((T, tn), lambda j: (0, j))  # lane-dense blocks

    so, to = pl.pallas_call(
        _dlinear_shared_kernel,
        out_shape=(jax.ShapeDtypeStruct((T, Np), out_dtype),
                   jax.ShapeDtypeStruct((T, Np), out_dtype)),
        grid_spec=pltpu.PrefetchScalarGridSpec(
            num_scalar_prefetch=0,
            grid=(nb,),
            in_specs=[w_spec, b_spec, w_spec, b_spec, x_spec, x_spec],
            out_specs=[x_spec, x_spec],
        ),
        compiler_params=pltpu.CompilerParams(
            dimension_semantics=("parallel",),
            vmem_limit_bytes=_VMEM_LIMIT),
    )(ws, bs, wt, bt, xs, xt)

    so = jnp.transpose(so[:, :N].reshape(T, B, F), (1, 0, 2))
    to = jnp.transpose(to[:, :N].reshape(T, B, F), (1, 0, 2))
    return so, to


# ----------------------------------------------------------------------------
# Individual mode (one Linear(T, T) per feature).
# out_f[b, o] = sum_t x_f[b, t] * W_f[o, t] + b_f[o]
#             = (x_f (B,T) @ W_f^T (T,T))[b, o] + b_f[o]        -> MXU matmul.
# ----------------------------------------------------------------------------
def _dlinear_indiv_kernel(ws_ref, bs_ref, wt_ref, bt_ref,
                          xs_ref, xt_ref, so_ref, to_ref):
    so_ref[...] = (
        jnp.dot(xs_ref[...], ws_ref[...], preferred_element_type=jnp.float32)
        + bs_ref[...]
    ).astype(so_ref.dtype)
    to_ref[...] = (
        jnp.dot(xt_ref[...], wt_ref[...], preferred_element_type=jnp.float32)
        + bt_ref[...]
    ).astype(to_ref.dtype)


def dlinear_individual(seasonal_init, trend_init, w_seasonal, b_seasonal,
                       w_trend, b_trend, compute_dtype=None):
    """seasonal_init/trend_init: [B, T, F]; w_*: (F, T_out, T_in); b_*: (F, T)."""
    B, T, F = seasonal_init.shape
    out_dtype = seasonal_init.dtype

    # Per-feature layout, T on the lane axis: (F, B, T).
    xs = jnp.transpose(seasonal_init, (2, 0, 1))
    xt = jnp.transpose(trend_init, (2, 0, 1))

    # Batch (sublane) tiling: keeps per-step VMEM bounded for large B.
    tb = 256 if B > 512 else _round_up(B, 8)
    Bp = _round_up(B, tb)
    if Bp != B:
        pad = ((0, 0), (0, Bp - B), (0, 0))
        xs = jnp.pad(xs, pad)
        xt = jnp.pad(xt, pad)
    nb = Bp // tb

    # Pre-transpose weights to (F, T_in, T_out) so the kernel does x @ w.
    # (For static params this transpose folds into the compiled graph once.)
    wsT = jnp.transpose(w_seasonal, (0, 2, 1))
    wtT = jnp.transpose(w_trend, (0, 2, 1))
    bs = b_seasonal.reshape(F, 1, T).astype(jnp.float32)
    bt = b_trend.reshape(F, 1, T).astype(jnp.float32)
    if compute_dtype is not None:
        xs, xt = xs.astype(compute_dtype), xt.astype(compute_dtype)
        wsT, wtT = wsT.astype(compute_dtype), wtT.astype(compute_dtype)

    # F is the outer grid axis so the (T,T) weight block index is unchanged
    # across consecutive batch-tile steps (no redundant weight DMA).
    w_spec = pl.BlockSpec((None, T, T), lambda f, i: (f, 0, 0))
    b_spec = pl.BlockSpec((None, 1, T), lambda f, i: (f, 0, 0))
    x_spec = pl.BlockSpec((None, tb, T), lambda f, i: (f, i, 0))

    so, to = pl.pallas_call(
        _dlinear_indiv_kernel,
        out_shape=(jax.ShapeDtypeStruct((F, Bp, T), out_dtype),
                   jax.ShapeDtypeStruct((F, Bp, T), out_dtype)),
        grid_spec=pltpu.PrefetchScalarGridSpec(
            num_scalar_prefetch=0,
            grid=(F, nb),
            in_specs=[w_spec, b_spec, w_spec, b_spec, x_spec, x_spec],
            out_specs=[x_spec, x_spec],
        ),
        compiler_params=pltpu.CompilerParams(
            dimension_semantics=("parallel", "parallel"),
            vmem_limit_bytes=_VMEM_LIMIT),
    )(wsT, bs, wtT, bt, xs, xt)

    so = jnp.transpose(so[:, :B, :], (1, 2, 0))
    to = jnp.transpose(to[:, :B, :], (1, 2, 0))
    return so, to


# ----------------------------------------------------------------------------
# Module-like wrapper mirroring the PyTorch BackboneDLinear init.
# ----------------------------------------------------------------------------
class BackboneDLinearPallas:
    def __init__(self, n_steps, n_features, individual=False, d_model=None,
                 key=None, compute_dtype=None):
        self.n_steps = n_steps
        self.n_features = n_features
        self.individual = individual
        self.compute_dtype = compute_dtype
        if key is None:
            key = jax.random.PRNGKey(0)
        bound = 1.0 / np.sqrt(n_steps)  # nn.Linear default bias init range
        k1, k2 = jax.random.split(key)
        if individual:
            self.w_seasonal = jnp.full(
                (n_features, n_steps, n_steps), 1.0 / n_steps, jnp.float32)
            self.w_trend = jnp.full(
                (n_features, n_steps, n_steps), 1.0 / n_steps, jnp.float32)
            self.b_seasonal = jax.random.uniform(
                k1, (n_features, n_steps), jnp.float32, -bound, bound)
            self.b_trend = jax.random.uniform(
                k2, (n_features, n_steps), jnp.float32, -bound, bound)
        else:
            if d_model is None:
                raise ValueError(
                    "The argument d_model is necessary for DLinear in the "
                    "non-individual mode.")
            self.w_seasonal = jnp.full(
                (n_steps, n_steps), 1.0 / n_steps, jnp.float32)
            self.w_trend = jnp.full(
                (n_steps, n_steps), 1.0 / n_steps, jnp.float32)
            self.b_seasonal = jax.random.uniform(
                k1, (n_steps,), jnp.float32, -bound, bound)
            self.b_trend = jax.random.uniform(
                k2, (n_steps,), jnp.float32, -bound, bound)

    def __call__(self, seasonal_init, trend_init):
        # seasonal_init, trend_init: [B, n_steps, n_features]
        if self.individual:
            return dlinear_individual(
                seasonal_init, trend_init,
                self.w_seasonal, self.b_seasonal,
                self.w_trend, self.b_trend,
                compute_dtype=self.compute_dtype)
        return dlinear_shared(
            seasonal_init, trend_init,
            self.w_seasonal, self.b_seasonal,
            self.w_trend, self.b_trend,
            compute_dtype=self.compute_dtype)


# ----------------------------------------------------------------------------
# Self-test against float32 numpy references (random weights so a W vs W^T
# orientation bug would be detected).
# ----------------------------------------------------------------------------
if __name__ == "__main__":
    B, T, F = 8, 24, 21   # small, DLinear-like; B*F=168 exercises lane tiling
    key = jax.random.PRNGKey(0)
    keys = jax.random.split(key, 10)
    seasonal = jax.random.normal(keys[0], (B, T, F), jnp.float32)
    trend = jax.random.normal(keys[1], (B, T, F), jnp.float32)
    s_np, t_np = np.asarray(seasonal), np.asarray(trend)
    bound = 1.0 / np.sqrt(T)

    # --- shared mode, random weights ---
    ws = jax.random.uniform(keys[2], (T, T), jnp.float32, -bound, bound)
    wt = jax.random.uniform(keys[3], (T, T), jnp.float32, -bound, bound)
    bs = jax.random.uniform(keys[4], (T,), jnp.float32, -bound, bound)
    bt = jax.random.uniform(keys[5], (T,), jnp.float32, -bound, bound)
    so, to = dlinear_shared(seasonal, trend, ws, bs, wt, bt)
    jax.block_until_ready((so, to))
    so_ref = (np.einsum("btf,ot->bof", s_np, np.asarray(ws))
              + np.asarray(bs)[None, :, None])
    to_ref = (np.einsum("btf,ot->bof", t_np, np.asarray(wt))
              + np.asarray(bt)[None, :, None])
    np.testing.assert_allclose(np.asarray(so), so_ref, rtol=2e-3, atol=2e-3)
    np.testing.assert_allclose(np.asarray(to), to_ref, rtol=2e-3, atol=2e-3)

    # --- individual mode, random per-feature weights ---
    wsi = jax.random.uniform(keys[6], (F, T, T), jnp.float32, -bound, bound)
    wti = jax.random.uniform(keys[7], (F, T, T), jnp.float32, -bound, bound)
    bsi = jax.random.uniform(keys[8], (F, T), jnp.float32, -bound, bound)
    bti = jax.random.uniform(keys[9], (F, T), jnp.float32, -bound, bound)
    so_i, to_i = dlinear_individual(seasonal, trend, wsi, bsi, wti, bti)
    jax.block_until_ready((so_i, to_i))
    so_i_ref = (np.einsum("btf,fot->bof", s_np, np.asarray(wsi))
                + np.asarray(bsi).T[None, :, :])
    to_i_ref = (np.einsum("btf,fot->bof", t_np, np.asarray(wti))
                + np.asarray(bti).T[None, :, :])
    np.testing.assert_allclose(np.asarray(so_i), so_i_ref, rtol=2e-3, atol=2e-3)
    np.testing.assert_allclose(np.asarray(to_i), to_i_ref, rtol=2e-3, atol=2e-3)

    # --- module wrappers with the spec's 1/n_steps weight init ---
    model = BackboneDLinearPallas(n_steps=T, n_features=F, individual=False,
                                  d_model=32, key=keys[2])
    mo_s, mo_t = model(seasonal, trend)
    jax.block_until_ready((mo_s, mo_t))
    mo_s_ref = (np.einsum("btf,ot->bof", s_np, np.asarray(model.w_seasonal))
                + np.asarray(model.b_seasonal)[None, :, None])
    np.testing.assert_allclose(np.asarray(mo_s), mo_s_ref, rtol=2e-3, atol=2e-3)

    model_i = BackboneDLinearPallas(n_steps=T, n_features=F, individual=True,
                                    key=keys[3])
    mi_s, mi_t = model_i(seasonal, trend)
    jax.block_until_ready((mi_s, mi_t))

    print("KERNEL_OK")
</pallas_src>

<mosaic_0001>
module attributes {stable_mosaic.version = 11 : i64} {
  func.func @_dlinear_shared_kernel(%arg0: i32, %arg1: memref<24x24xf32, #tpu.memory_space<vmem>>, %arg2: memref<24x1xf32, #tpu.memory_space<vmem>>, %arg3: memref<24x24xf32, #tpu.memory_space<vmem>>, %arg4: memref<24x1xf32, #tpu.memory_space<vmem>>, %arg5: memref<24x128xf32, #tpu.memory_space<vmem>>, %arg6: memref<24x128xf32, #tpu.memory_space<vmem>>, %arg7: memref<24x128xf32, #tpu.memory_space<vmem>>, %arg8: memref<24x128xf32, #tpu.memory_space<vmem>>) attributes {dimension_semantics = [#tpu.dimension_semantics<parallel>], iteration_bounds = array<i64: 2>, scalar_prefetch = 0 : i64, scratch_operands = 0 : i64, tpu.core_type = #tpu.core_type<tc>, window_params = [{pipeline_mode = #tpu.pipeline_mode<synchronous>, transform_indices = @transform_0, window_bounds = array<i64: 24, 24>}, {pipeline_mode = #tpu.pipeline_mode<synchronous>, transform_indices = @transform_1, window_bounds = array<i64: 24, 1>}, {pipeline_mode = #tpu.pipeline_mode<synchronous>, transform_indices = @transform_2, window_bounds = array<i64: 24, 24>}, {pipeline_mode = #tpu.pipeline_mode<synchronous>, transform_indices = @transform_3, window_bounds = array<i64: 24, 1>}, {transform_indices = @transform_4, window_bounds = array<i64: 24, 128>}, {transform_indices = @transform_5, window_bounds = array<i64: 24, 128>}, {transform_indices = @transform_6, window_bounds = array<i64: 24, 128>}, {transform_indices = @transform_7, window_bounds = array<i64: 24, 128>}]} {
    %c0 = arith.constant 0 : index
    %c0_0 = arith.constant 0 : index
    %0 = vector.load %arg1[%c0, %c0_0] : memref<24x24xf32, #tpu.memory_space<vmem>>, vector<24x24xf32>
    %c0_1 = arith.constant 0 : index
    %c0_2 = arith.constant 0 : index
    %1 = vector.load %arg5[%c0_1, %c0_2] : memref<24x128xf32, #tpu.memory_space<vmem>>, vector<24x128xf32>
    %cst = arith.constant dense<0.000000e+00> : vector<24x128xf32>
    %2 = tpu.matmul %0, %1, %cst {dimension_numbers = #tpu.dot_dimension_numbers<[1], [0], [0], [1], [0, 0, 1, 1], [], []>} : vector<24x24xf32>, vector<24x128xf32>, vector<24x128xf32> -> vector<24x128xf32>
    %c0_3 = arith.constant 0 : index
    %c0_4 = arith.constant 0 : index
    %3 = vector.load %arg2[%c0_3, %c0_4] : memref<24x1xf32, #tpu.memory_space<vmem>>, vector<24x1xf32>
    %4 = vector.broadcast %3 : vector<24x1xf32> to vector<24x128xf32>
    %5 = arith.addf %2, %4 : vector<24x128xf32>
    %c0_5 = arith.constant 0 : index
    %c0_6 = arith.constant 0 : index
    %6 = vector.load %arg7[%c0_5, %c0_6] : memref<24x128xf32, #tpu.memory_space<vmem>>, vector<24x128xf32>
    tpu.vector_store %arg7[%c0_5, %c0_6], %5 {strides = array<i32>} : memref<24x128xf32, #tpu.memory_space<vmem>>, vector<24x128xf32>,
    %c0_7 = arith.constant 0 : index
    %c0_8 = arith.constant 0 : index
    %7 = vector.load %arg3[%c0_7, %c0_8] : memref<24x24xf32, #tpu.memory_space<vmem>>, vector<24x24xf32>
    %c0_9 = arith.constant 0 : index
    %c0_10 = arith.constant 0 : index
    %8 = vector.load %arg6[%c0_9, %c0_10] : memref<24x128xf32, #tpu.memory_space<vmem>>, vector<24x128xf32>
    %cst_11 = arith.constant dense<0.000000e+00> : vector<24x128xf32>
    %9 = tpu.matmul %7, %8, %cst_11 {dimension_numbers = #tpu.dot_dimension_numbers<[1], [0], [0], [1], [0, 0, 1, 1], [], []>} : vector<24x24xf32>, vector<24x128xf32>, vector<24x128xf32> -> vector<24x128xf32>
    %c0_12 = arith.constant 0 : index
    %c0_13 = arith.constant 0 : index
    %10 = vector.load %arg4[%c0_12, %c0_13] : memref<24x1xf32, #tpu.memory_space<vmem>>, vector<24x1xf32>
    %11 = vector.broadcast %10 : vector<24x1xf32> to vector<24x128xf32>
    %12 = arith.addf %9, %11 : vector<24x128xf32>
    %c0_14 = arith.constant 0 : index
    %c0_15 = arith.constant 0 : index
    %13 = vector.load %arg8[%c0_14, %c0_15] : memref<24x128xf32, #tpu.memory_space<vmem>>, vector<24x128xf32>
    tpu.vector_store %arg8[%c0_14, %c0_15], %12 {strides = array<i32>} : memref<24x128xf32, #tpu.memory_space<vmem>>, vector<24x128xf32>,
    return
  }
  func.func @transform_0(%arg0: i32) -> (i32, i32) {
    %c0_i32 = arith.constant 0 : i32
    %c0_i32_0 = arith.constant 0 : i32
    %c0_i32_1 = arith.constant 0 : i32
    return %c0_i32, %c0_i32_0 : i32, i32
  }
  func.func @transform_1(%arg0: i32) -> (i32, i32) {
    %c0_i32 = arith.constant 0 : i32
    %c0_i32_0 = arith.constant 0 : i32
    %c0_i32_1 = arith.constant 0 : i32
    return %c0_i32, %c0_i32_0 : i32, i32
  }
  func.func @transform_2(%arg0: i32) -> (i32, i32) {
    %c0_i32 = arith.constant 0 : i32
    %c0_i32_0 = arith.constant 0 : i32
    %c0_i32_1 = arith.constant 0 : i32
    return %c0_i32, %c0_i32_0 : i32, i32
  }
  func.func @transform_3(%arg0: i32) -> (i32, i32) {
    %c0_i32 = arith.constant 0 : i32
    %c0_i32_0 = arith.constant 0 : i32
    %c0_i32_1 = arith.constant 0 : i32
    return %c0_i32, %c0_i32_0 : i32, i32
  }
  func.func @transform_4(%arg0: i32) -> (i32, i32) {
    %c0_i32 = arith.constant 0 : i32
    %c0_i32_0 = arith.constant 0 : i32
    return %c0_i32, %arg0 : i32, i32
  }
  func.func @transform_5(%arg0: i32) -> (i32, i32) {
    %c0_i32 = arith.constant 0 : i32
    %c0_i32_0 = arith.constant 0 : i32
    return %c0_i32, %arg0 : i32, i32
  }
  func.func @transform_6(%arg0: i32) -> (i32, i32) {
    %c0_i32 = arith.constant 0 : i32
    %c0_i32_0 = arith.constant 0 : i32
    return %c0_i32, %arg0 : i32, i32
  }
  func.func @transform_7(%arg0: i32) -> (i32, i32) {
    %c0_i32 = arith.constant 0 : i32
    %c0_i32_0 = arith.constant 0 : i32
    return %c0_i32, %arg0 : i32, i32
  }
}

</mosaic_0001>

<llo_original>
// kernel: tpu_custom_call.1
$region0: #{tpu_custom_call.1}
  #allocation0 [shape = 'u32[]', space=smem, size = 0x4, offset = 0x4, fixed_abs, tag = 'smem constant byte address 0x4 - core index']
  #allocation1 [shape = 'u32[144,128]{1,0:T(1,128)}', space=vmem, size = 0x12000, scoped, tag = 'internal scratch']
  %s0 = inlined_call_operand.hbm [shape: f32[24,24], index: 0, kind: input, shape index: {}]
  %s1 = inlined_call_operand.vmem [shape: f32[24,1], index: 1, kind: input, shape index: {}]
  %s2 = inlined_call_operand.hbm [shape: f32[24,24], index: 2, kind: input, shape index: {}]
  %s3 = inlined_call_operand.vmem [shape: f32[24,1], index: 3, kind: input, shape index: {}]
  %s4 = inlined_call_operand.vmem [shape: f32[24,256], index: 4, kind: input, shape index: {}]
  %s5 = inlined_call_operand.hbm [shape: f32[24,256], index: 5, kind: input, shape index: {}]
  %s6 = inlined_call_operand.hbm [shape: f32[24,256], index: 6, kind: output, shape index: {0}]
  %s7 = inlined_call_operand.hbm [shape: f32[24,256], index: 7, kind: output, shape index: {1}]
  %8 = xla_tuple %s6, %s7
  %s9 = sld [smem:[#allocation0]]
  $region115: #{tpu_custom_call.1} parent=0
    _
  %s11 = ssub.s32 1, %s9
  %s12 = scalar_select 0, %s11, %s9
  $region1: #{tpu_custom_call.1} parent=0
    #allocation2 [shape = 'u8[12288]{0}', space=vmem, size = 0x3000, scoped, tag = 'input window, operand 0, single buffered']
    #allocation3 [shape = 's32[2]{0}', space=sflag, size = 0x8, scoped, tag = 'scoped memory for tpu_custom_call.1']
    #allocation4 [shape = 's32[2]{0}', space=sflag, size = 0x8, scoped, tag = 'scoped memory for tpu_custom_call.1']
    #allocation5 [shape = 'u8[12288]{0}', space=vmem, size = 0x3000, scoped, tag = 'input window, operand 2, single buffered']
    #allocation6 [shape = 's32[1]{0}', space=sflag, size = 0x4, scoped, tag = 'scoped memory for tpu_custom_call.1']
    #allocation7 [shape = 'u8[24576]{0}', space=vmem, size = 0x6000, scoped, tag = 'input window, operand 4']
    #allocation8 [shape = 'u8[24576]{0}', space=vmem, size = 0x6000, scoped, tag = 'input window, operand 5']
    #allocation9 [shape = 'u8[24576]{0}', space=vmem, size = 0x6000, scoped, tag = 'output window, operand 0']
    #allocation10 [shape = 'u8[24576]{0}', space=vmem, size = 0x6000, scoped, tag = 'output window, operand 1']
    #allocation11 [shape = 's32[2]{0}', space=sflag, size = 0x8, scoped, tag = 'scoped memory for tpu_custom_call.1']
    %13 = vsyncpa [#allocation3], 0
    %14 = vsyncpa [#allocation6], 0
    %15 = vsyncpa [#allocation4], 0
    %s16 = scalar_lea.sflag [#allocation4], 1
    %17 = vsyncpa %s16, 0
    %18 = vsyncpa [#allocation11], 0
    %s19 = scalar_lea.sflag [#allocation11], 1
    %20 = vsyncpa %s19, 0
    loop: start=0, step=1, limit=4
    $region2: #{tpu_custom_call.1} parent=1 // loop_pre_header
      _
    $region3: #{tpu_custom_call.1} parent=1 // loop_header
      %s22 = sphi 0, %s26
      %p23 = scmp.ge.s32.totalorder %s22, 4
      %s30 = sphi 0, %s30
      %s32 = sphi 0, %s30
      %s33 = sphi 0, %s32
      %s47 = sphi 0, %s33
      %s51 = sphi 0, %s51
      %s53 = sphi 0, %s51
      %s54 = sphi 0, %s53
      %s68 = sphi 0, %s54
      %s72 = sphi 0, %s72
      %s74 = sphi 0, %s72
      %s75 = sphi 0, %s74
      %s89 = sphi 0, %s75
      %s93 = sphi 0, %s93
      %s95 = sphi 0, %s93
      %s96 = sphi 0, %s95
      %s110 = sphi 0, %s96
      %s116 = sphi 0, %s118
      %s119 = sphi 0, %s116
      %s120 = sphi 0, %s119
      %s136 = sphi 0, %s120
      %s142 = sphi 0, %s144
      %s145 = sphi 0, %s142
      %s146 = sphi 0, %s145
      %s162 = sphi 0, %s146
      %s168 = sphi 0, %s170
      %s171 = sphi 0, %s168
      %s172 = sphi 0, %s171
      %s188 = sphi 0, %s172
      %s194 = sphi 0, %s196
      %s197 = sphi 0, %s194
      %s198 = sphi 0, %s197
      %s214 = sphi 0, %s198
    $region4: #{tpu_custom_call.1} parent=1 // loop_header_branch
      %25 = sbr.rel (%p23) target = $region8
    $region5: #{tpu_custom_call.1} parent=1 // loop_body
      %s27 = ssub.s32 %s22, 1
      %s28 = ssub.s32 %s22, 2
      %s29 = sadd.s32 %s22, 1
      %s31 = sadd.s32 %s30, 1
      %p34 = scmp.eq.s32.totalorder %s22, 1
      %p35 = scmp.ne.s32.totalorder %s30, %s32
      %p36 = scmp.eq.s32.totalorder %s22, 0
      %p37 = por %p35, %p36
      %p38 = scmp.ne.s32.totalorder %s30, %s32
      %p39 = scmp.eq.s32.totalorder %s27, 1
      %p40 = por %p38, %p39
      %p41 = scmp.ne.s32.totalorder %s32, %s33
      %p42 = scmp.eq.s32.totalorder %s27, 0
      %p43 = por %p41, %p42
      %p44 = scmp.ne.s32.totalorder %s32, %s33
      %p45 = scmp.eq.s32.totalorder %s28, 1
      %p46 = por %p44, %p45
      %p48 = scmp.ne.s32.totalorder %s33, %s47
      %p49 = scmp.eq.s32.totalorder %s28, 0
      %p50 = por %p48, %p49
      %s52 = sadd.s32 %s51, 1
      %p55 = scmp.eq.s32.totalorder %s22, 1
      %p56 = scmp.ne.s32.totalorder %s51, %s53
      %p57 = scmp.eq.s32.totalorder %s22, 0
      %p58 = por %p56, %p57
      %p59 = scmp.ne.s32.totalorder %s51, %s53
      %p60 = scmp.eq.s32.totalorder %s27, 1
      %p61 = por %p59, %p60
      %p62 = scmp.ne.s32.totalorder %s53, %s54
      %p63 = scmp.eq.s32.totalorder %s27, 0
      %p64 = por %p62, %p63
      %p65 = scmp.ne.s32.totalorder %s53, %s54
      %p66 = scmp.eq.s32.totalorder %s28, 1
      %p67 = por %p65, %p66
      %p69 = scmp.ne.s32.totalorder %s54, %s68
      %p70 = scmp.eq.s32.totalorder %s28, 0
      %p71 = por %p69, %p70
      %s73 = sadd.s32 %s72, 1
      %p76 = scmp.eq.s32.totalorder %s22, 1
      %p77 = scmp.ne.s32.totalorder %s72, %s74
      %p78 = scmp.eq.s32.totalorder %s22, 0
      %p79 = por %p77, %p78
      %p80 = scmp.ne.s32.totalorder %s72, %s74
      %p81 = scmp.eq.s32.totalorder %s27, 1
      %p82 = por %p80, %p81
      %p83 = scmp.ne.s32.totalorder %s74, %s75
      %p84 = scmp.eq.s32.totalorder %s27, 0
      %p85 = por %p83, %p84
      %p86 = scmp.ne.s32.totalorder %s74, %s75
      %p87 = scmp.eq.s32.totalorder %s28, 1
      %p88 = por %p86, %p87
      %p90 = scmp.ne.s32.totalorder %s75, %s89
      %p91 = scmp.eq.s32.totalorder %s28, 0
      %p92 = por %p90, %p91
      %s94 = sadd.s32 %s93, 1
      %p97 = scmp.eq.s32.totalorder %s22, 1
      %p98 = scmp.ne.s32.totalorder %s93, %s95
      %p99 = scmp.eq.s32.totalorder %s22, 0
      %p100 = por %p98, %p99
      %p101 = scmp.ne.s32.totalorder %s93, %s95
      %p102 = scmp.eq.s32.totalorder %s27, 1
      %p103 = por %p101, %p102
      %p104 = scmp.ne.s32.totalorder %s95, %s96
      %p105 = scmp.eq.s32.totalorder %s27, 0
      %p106 = por %p104, %p105
      %p107 = scmp.ne.s32.totalorder %s95, %s96
      %p108 = scmp.eq.s32.totalorder %s28, 1
      %p109 = por %p107, %p108
      %p111 = scmp.ne.s32.totalorder %s96, %s110
      %p112 = scmp.eq.s32.totalorder %s28, 0
      %p113 = por %p111, %p112
      %s114 = ssub.s32 %s22, %s29
      %p115 = scmp.eq.s32.totalorder %s114, 0
      %s117 = sadd.s32 %s116, 1
      %s118 = scalar_select %p115, %s116, %s117
      %p121 = pneg %p115
      %p122 = scmp.eq.s32.totalorder %s22, 1
      %p123 = por %p121, %p122
      %p124 = scmp.ne.s32.totalorder %s116, %s119
      %p125 = scmp.eq.s32.totalorder %s22, 0
      %p126 = por %p124, %p125
      %p127 = scmp.ne.s32.totalorder %s116, %s119
      %p128 = scmp.eq.s32.totalorder %s27, 1
      %p129 = por %p127, %p128
      %p130 = scmp.ne.s32.totalorder %s119, %s120
      %p131 = scmp.eq.s32.totalorder %s27, 0
      %p132 = por %p130, %p131
      %p133 = scmp.ne.s32.totalorder %s119, %s120
      %p134 = scmp.eq.s32.totalorder %s28, 1
      %p135 = por %p133, %p134
      %p137 = scmp.ne.s32.totalorder %s120, %s136
      %p138 = scmp.eq.s32.totalorder %s28, 0
      %p139 = por %p137, %p138
      %s140 = ssub.s32 %s22, %s29
      %p141 = scmp.eq.s32.totalorder %s140, 0
      %s143 = sadd.s32 %s142, 1
      %s144 = scalar_select %p141, %s142, %s143
      %p147 = pneg %p141
      %p148 = scmp.eq.s32.totalorder %s22, 1
      %p149 = por %p147, %p148
      %p150 = scmp.ne.s32.totalorder %s142, %s145
      %p151 = scmp.eq.s32.totalorder %s22, 0
      %p152 = por %p150, %p151
      %p153 = scmp.ne.s32.totalorder %s142, %s145
      %p154 = scmp.eq.s32.totalorder %s27, 1
      %p155 = por %p153, %p154
      %p156 = scmp.ne.s32.totalorder %s145, %s146
      %p157 = scmp.eq.s32.totalorder %s27, 0
      %p158 = por %p156, %p157
      %p159 = scmp.ne.s32.totalorder %s145, %s146
      %p160 = scmp.eq.s32.totalorder %s28, 1
      %p161 = por %p159, %p160
      %p163 = scmp.ne.s32.totalorder %s146, %s162
      %p164 = scmp.eq.s32.totalorder %s28, 0
      %p165 = por %p163, %p164
      %s166 = ssub.s32 %s22, %s29
      %p167 = scmp.eq.s32.totalorder %s166, 0
      %s169 = sadd.s32 %s168, 1
      %s170 = scalar_select %p167, %s168, %s169
      %p173 = pneg %p167
      %p174 = scmp.eq.s32.totalorder %s22, 1
      %p175 = por %p173, %p174
      %p176 = scmp.ne.s32.totalorder %s168, %s171
      %p177 = scmp.eq.s32.totalorder %s22, 0
      %p178 = por %p176, %p177
      %p179 = scmp.ne.s32.totalorder %s168, %s171
      %p180 = scmp.eq.s32.totalorder %s27, 1
      %p181 = por %p179, %p180
      %p182 = scmp.ne.s32.totalorder %s171, %s172
      %p183 = scmp.eq.s32.totalorder %s27, 0
      %p184 = por %p182, %p183
      %p185 = scmp.ne.s32.totalorder %s171, %s172
      %p186 = scmp.eq.s32.totalorder %s28, 1
      %p187 = por %p185, %p186
      %p189 = scmp.ne.s32.totalorder %s172, %s188
      %p190 = scmp.eq.s32.totalorder %s28, 0
      %p191 = por %p189, %p190
      %s192 = ssub.s32 %s22, %s29
      %p193 = scmp.eq.s32.totalorder %s192, 0
      %s195 = sadd.s32 %s194, 1
      %s196 = scalar_select %p193, %s194, %s195
      %p199 = pneg %p193
      %p200 = scmp.eq.s32.totalorder %s22, 1
      %p201 = por %p199, %p200
      %p202 = scmp.ne.s32.totalorder %s194, %s197
      %p203 = scmp.eq.s32.totalorder %s22, 0
      %p204 = por %p202, %p203
      %p205 = scmp.ne.s32.totalorder %s194, %s197
      %p206 = scmp.eq.s32.totalorder %s27, 1
      %p207 = por %p205, %p206
      %p208 = scmp.ne.s32.totalorder %s197, %s198
      %p209 = scmp.eq.s32.totalorder %s27, 0
      %p210 = por %p208, %p209
      %p211 = scmp.ne.s32.totalorder %s197, %s198
      %p212 = scmp.eq.s32.totalorder %s28, 1
      %p213 = por %p211, %p212
      %p215 = scmp.ne.s32.totalorder %s198, %s214
      %p216 = scmp.eq.s32.totalorder %s28, 0
      %p217 = por %p215, %p216
      %p218 = scmp.le.s32.totalorder 1, %s22
      %p219 = scmp.lt.s32.totalorder %s22, 3
      %p220 = pnand %p218, %p219
      %p221 = pneg %p220
      // Predicated region
      $region9: #{tpu_custom_call.1} parent=5 // pred_check
        _
      $region10: #{tpu_custom_call.1} parent=5 // pred_check_branch
        %223 = sbr.rel (%p220) target = $region12
      $region11: #{tpu_custom_call.1} parent=5 // pred_region
        %s224 = ssub.s32 %s22, 1
        // Predicated region
        $region13: #{tpu_custom_call.1} parent=11 // pred_check
          %p225 = pneg %p43
        $region14: #{tpu_custom_call.1} parent=11 // pred_check_branch
          %227 = sbr.rel (%p225) target = $region16
        $region15: #{tpu_custom_call.1} parent=11 // pred_region
          %s229 = ssub.s32 384, 384
          %230 = vsyncadd [#allocation3], %s229
          %s231 = sshll.u32 [#allocation2], 4
          %s232 = int_to_ptr.vmem [resolvable:$true] %s231
          %237 = dma.hbm_to_vmem [thread:$0]  %s0, 384, %s232, [#allocation3], 128, 128, 8
        $region16: #{tpu_custom_call.1} parent=11 // pred_fallthru
          _
        // Predicated region
        $region17: #{tpu_custom_call.1} parent=11 // pred_check
          %p238 = pneg %p64
        $region18: #{tpu_custom_call.1} parent=11 // pred_check_branch
          %240 = sbr.rel (%p238) target = $region20
        $region19: #{tpu_custom_call.1} parent=11 // pred_region
          _
        $region20: #{tpu_custom_call.1} parent=11 // pred_fallthru
          _
        // Predicated region
        $region21: #{tpu_custom_call.1} parent=11 // pred_check
          %p241 = pneg %p85
        $region22: #{tpu_custom_call.1} parent=11 // pred_check_branch
          %243 = sbr.rel (%p241) target = $region24
        $region23: #{tpu_custom_call.1} parent=11 // pred_region
          %s245 = ssub.s32 384, 384
          %246 = vsyncadd [#allocation6], %s245
          %s247 = sshll.u32 [#allocation5], 4
          %s248 = int_to_ptr.vmem [resolvable:$true] %s247
          %253 = dma.hbm_to_vmem [thread:$0]  %s2, 384, %s248, [#allocation6], 128, 128, 8
        $region24: #{tpu_custom_call.1} parent=11 // pred_fallthru
          _
        // Predicated region
        $region25: #{tpu_custom_call.1} parent=11 // pred_check
          %p254 = pneg %p106
        $region26: #{tpu_custom_call.1} parent=11 // pred_check_branch
          %256 = sbr.rel (%p254) target = $region28
        $region27: #{tpu_custom_call.1} parent=11 // pred_region
          _
        $region28: #{tpu_custom_call.1} parent=11 // pred_fallthru
          _
      $region12: #{tpu_custom_call.1} parent=5 // pred_fallthru
        _
      %p257 = scmp.lt.s32.totalorder %s22, 2
      // Predicated region
      $region29: #{tpu_custom_call.1} parent=5 // pred_check
        %p258 = pneg %p257
      $region30: #{tpu_custom_call.1} parent=5 // pred_check_branch
        %260 = sbr.rel (%p258) target = $region32
      $region31: #{tpu_custom_call.1} parent=5 // pred_region
        // Predicated region
        $region33: #{tpu_custom_call.1} parent=31 // pred_check
          %p261 = pneg %p126
        $region34: #{tpu_custom_call.1} parent=31 // pred_check_branch
          %263 = sbr.rel (%p261) target = $region36
        $region35: #{tpu_custom_call.1} parent=31 // pred_region
          %s264 = sand.u32 %s116, 1
          %s265 = sand.u32 %s116, 1
          %s266 = smul.addr %s265, 24
          %s267 = scalar_lea.vmem [#allocation7], %s266
          %s268 = smul.addr %s22, 8
          %s269 = scalar_lea.vmem %s4, %s268
          // Predicated region
          $region37: #{tpu_custom_call.1} parent=35 // pred_check
            _
          $region38: #{tpu_custom_call.1} parent=35 // pred_check_branch
            %271 = sbr.rel (0) target = $region40
          $region39: #{tpu_custom_call.1} parent=35 // pred_region
            // Predicated region
            $region41: #{tpu_custom_call.1} parent=39 // pred_check
              _
            $region42: #{tpu_custom_call.1} parent=39 // pred_check_branch
              %273 = sbr.rel (0) target = $region44
            $region43: #{tpu_custom_call.1} parent=39 // pred_region
              // Predicated region
              $region56: #{tpu_custom_call.1} parent=43 // pred_check
                _
              $region57: #{tpu_custom_call.1} parent=43 // pred_check_branch
                %293 = sbr.rel (0) target = $region59
              $region58: #{tpu_custom_call.1} parent=43 // pred_region
                loop: start=0, step=1, limit=1
                $region60: #{tpu_custom_call.1} parent=58 // loop_pre_header
                  _
                $region61: #{tpu_custom_call.1} parent=58 // loop_header
                  %s295 = sphi 0, %s299
                  %p296 = scmp.ge.s32.totalorder %s295, 1
                  %s300 = sphi %s269, %s269
                  %s301 = sphi %s267, %s267
                $region62: #{tpu_custom_call.1} parent=58 // loop_header_branch
                  %298 = sbr.rel (%p296) target = $region66
                $region63: #{tpu_custom_call.1} parent=58 // loop_body
                  %v302 = vld [vmem:[%s300] sm:$0xff]
                  %303 = vst [vmem:[%s301] sm:$0xff] %v302
                  %v304 = vld [vmem:[%s300 + $0x10] sm:$0xff]
                  %305 = vst [vmem:[%s301 + $0x8] sm:$0xff] %v304
                  %v306 = vld [vmem:[%s300 + $0x20] sm:$0xff]
                  %307 = vst [vmem:[%s301 + $0x10] sm:$0xff] %v306
                $region64: #{tpu_custom_call.1} parent=58 // loop_footer
                  %s299 = sadd.s32 1, %s295
                $region65: #{tpu_custom_call.1} parent=58 // loop_footer_branch
                  %294 = sbr.rel target = $region61
                $region66: #{tpu_custom_call.1} parent=58 // loop_exit
                  _
              $region59: #{tpu_custom_call.1} parent=43 // pred_fallthru
                _
              // Predicated region
              $region67: #{tpu_custom_call.1} parent=43 // pred_check
                _
              $region68: #{tpu_custom_call.1} parent=43 // pred_check_branch
                %309 = sbr.rel target = $region70
              $region69: #{tpu_custom_call.1} parent=43 // pred_region
                _
              $region70: #{tpu_custom_call.1} parent=43 // pred_fallthru
                _
            $region44: #{tpu_custom_call.1} parent=39 // pred_fallthru
              _
            // Predicated region
            $region45: #{tpu_custom_call.1} parent=39 // pred_check
              _
            $region46: #{tpu_custom_call.1} parent=39 // pred_check_branch
              %275 = sbr.rel target = $region48
            $region47: #{tpu_custom_call.1} parent=39 // pred_region
              %s277 = ssub.s32 256, 1
              loop: start=0, step=1, limit=1
              $region49: #{tpu_custom_call.1} parent=47 // loop_pre_header
                _
              $region50: #{tpu_custom_call.1} parent=47 // loop_header
                %s279 = sphi 0, %s283
                %p280 = scmp.ge.s32.totalorder %s279, 1
                %s284 = sphi %s269, %s269
                %s285 = sphi %s267, %s267
              $region51: #{tpu_custom_call.1} parent=47 // loop_header_branch
                %282 = sbr.rel (%p280) target = $region55
              $region52: #{tpu_custom_call.1} parent=47 // loop_body
                %v286 = vld [vmem:[%s284] sm:%s277]
                %287 = vst [vmem:[%s285] sm:%s277] %v286
                %v288 = vld [vmem:[%s284 + $0x10] sm:%s277]
                %289 = vst [vmem:[%s285 + $0x8] sm:%s277] %v288
                %v290 = vld [vmem:[%s284 + $0x20] sm:%s277]
                %291 = vst [vmem:[%s285 + $0x10] sm:%s277] %v290
              $region53: #{tpu_custom_call.1} parent=47 // loop_footer
                %s283 = sadd.s32 1, %s279
              $region54: #{tpu_custom_call.1} parent=47 // loop_footer_branch
                %278 = sbr.rel target = $region50
              $region55: #{tpu_custom_call.1} parent=47 // loop_exit
                _
            $region48: #{tpu_custom_call.1} parent=39 // pred_fallthru
              _
          $region40: #{tpu_custom_call.1} parent=35 // pred_fallthru
            _
          %310 = vnop
        $region36: #{tpu_custom_call.1} parent=31 // pred_fallthru
          _
        // Predicated region
        $region71: #{tpu_custom_call.1} parent=31 // pred_check
          %p311 = pneg %p152
        $region72: #{tpu_custom_call.1} parent=31 // pred_check_branch
          %313 = sbr.rel (%p311) target = $region74
        $region73: #{tpu_custom_call.1} parent=31 // pred_region
          %s314 = sand.u32 %s22, 1
          %s315 = scalar_lea.sflag [#allocation3], %s314
          %s316 = sand.u32 %s142, 1
          %s317 = smul.addr %s316, 24
          %s318 = scalar_lea.vmem [#allocation8], %s317
          %s320 = ssub.s32 384, 384
          %321 = vsyncadd %s315, %s320
          %s322 = smul.addr %s22, 128
          %s323 = scalar_lea.hbm %s5, %s322
          %s324 = sshll.u32 %s318, 4
          %s325 = int_to_ptr.vmem [resolvable:$true] %s324
          %330 = dma.hbm_to_vmem [thread:$0]  %s323, 384, %s325, %s315, 256, 128, 8
        $region74: #{tpu_custom_call.1} parent=31 // pred_fallthru
          _
      $region32: #{tpu_custom_call.1} parent=5 // pred_fallthru
        _
      %p331 = scmp.le.s32.totalorder 1, %s22
      %p332 = scmp.lt.s32.totalorder %s22, 3
      %p333 = pnand %p331, %p332
      %p334 = pneg %p333
      // Predicated region
      $region75: #{tpu_custom_call.1} parent=5 // pred_check
        _
      $region76: #{tpu_custom_call.1} parent=5 // pred_check_branch
        %336 = sbr.rel (%p333) target = $region78
      $region77: #{tpu_custom_call.1} parent=5 // pred_region
        %s337 = ssub.s32 %s22, 1
        // Predicated region
        $region79: #{tpu_custom_call.1} parent=77 // pred_check
          %p338 = pneg %p43
        $region80: #{tpu_custom_call.1} parent=77 // pred_check_branch
          %340 = sbr.rel (%p338) target = $region82
        $region81: #{tpu_custom_call.1} parent=77 // pred_region
          %341 = dma.done [#allocation3], 384
        $region82: #{tpu_custom_call.1} parent=77 // pred_fallthru
          _
        // Predicated region
        $region83: #{tpu_custom_call.1} parent=77 // pred_check
          %p342 = pneg %p85
        $region84: #{tpu_custom_call.1} parent=77 // pred_check_branch
          %344 = sbr.rel (%p342) target = $region86
        $region85: #{tpu_custom_call.1} parent=77 // pred_region
          %345 = dma.done [#allocation6], 384
        $region86: #{tpu_custom_call.1} parent=77 // pred_fallthru
          _
        %s346 = sand.u32 %s119, 1
        %s347 = sand.u32 %s119, 1
        %s348 = smul.addr %s347, 24
        %s349 = scalar_lea.vmem [#allocation7], %s348
        // Predicated region
        $region87: #{tpu_custom_call.1} parent=77 // pred_check
          %p350 = pneg %p132
        $region88: #{tpu_custom_call.1} parent=77 // pred_check_branch
          %352 = sbr.rel (%p350) target = $region90
        $region89: #{tpu_custom_call.1} parent=77 // pred_region
          _
        $region90: #{tpu_custom_call.1} parent=77 // pred_fallthru
          _
        %s353 = sand.u32 %s27, 1
        %s354 = scalar_lea.sflag [#allocation3], %s353
        %s355 = sand.u32 %s145, 1
        %s356 = smul.addr %s355, 24
        %s357 = scalar_lea.vmem [#allocation8], %s356
        // Predicated region
        $region91: #{tpu_custom_call.1} parent=77 // pred_check
          %p358 = pneg %p158
        $region92: #{tpu_custom_call.1} parent=77 // pred_check_branch
          %360 = sbr.rel (%p358) target = $region94
        $region93: #{tpu_custom_call.1} parent=77 // pred_region
          %361 = dma.done %s354, 384
        $region94: #{tpu_custom_call.1} parent=77 // pred_fallthru
          _
        %p362 = pneg %p43
        %p363 = pneg %p40
        %p364 = pneg %p64
        %p365 = pneg %p61
        %p366 = pneg %p85
        %p367 = pneg %p82
        %p368 = pneg %p106
        %p369 = pneg %p103
        %s370 = sand.u32 %s119, 1
        %s371 = sand.u32 %s119, 1
        %s372 = smul.addr %s371, 24
        %s373 = scalar_lea.vmem [#allocation7], %s372
        %p374 = pneg %p132
        %p375 = pneg %p129
        %s376 = sand.u32 %s27, 1
        %s377 = scalar_lea.sflag [#allocation3], %s376
        %s378 = sand.u32 %s145, 1
        %s379 = smul.addr %s378, 24
        %s380 = scalar_lea.vmem [#allocation8], %s379
        %p381 = pneg %p158
        %p382 = pneg %p155
        %p383 = pneg %p184
        %p384 = pneg %p181
        %s385 = sand.u32 %s171, 1
        %s386 = scalar_lea.sflag [#allocation4], %s385
        %s387 = sand.u32 %s171, 1
        %s388 = smul.addr %s387, 24
        %s389 = scalar_lea.vmem [#allocation9], %s388
        %p390 = pneg %p210
        %p391 = pneg %p207
        %s392 = sand.u32 %s197, 1
        %s393 = scalar_lea.sflag [#allocation11], %s392
        %s394 = sand.u32 %s197, 1
        %s395 = smul.addr %s394, 24
        %s396 = scalar_lea.vmem [#allocation10], %s395
        %v397 = vld [vmem:[#allocation2] sm:$0xff]
        %v398 = vld [vmem:[#allocation2 + $0x8] sm:$0xff]
        %v399 = vld [vmem:[#allocation2 + $0x10] sm:$0xff]
        %v400 = vld [vmem:[%s349] sm:$0xff]
        %v401 = vld [vmem:[%s349 + $0x8] sm:$0xff]
        %v402 = vld [vmem:[%s349 + $0x10] sm:$0xff]
        %v403 = vld [vmem:[%s1] sm:$0xff]
        %v404 = vld [vmem:[%s1 + $0x8] sm:$0xff]
        %v405 = vld [vmem:[%s1 + $0x10] sm:$0xff]
        %407 = vset.pattern.permute.xlu0 0
        %408 = vperm.xlu0 %407, %v403
        %v409 = vpop.permute.xlu0 %408
        %412 = vset.pattern.permute.xlu0 0
        %413 = vperm.xlu0 %412, %v404
        %v414 = vpop.permute.xlu0 %413
        %417 = vset.pattern.permute.xlu0 0
        %418 = vperm.xlu0 %417, %v405
        %v419 = vpop.permute.xlu0 %418
        %vm421 = vcmask 195584
        %v423 = vsel %vm421, %v397, 0
        %v426 = vsel %vm421, %v398, 0
        %v429 = vsel %vm421, %v399, 0
        %431 = vmatprep.subr.mxu0 0.0
        %432 = vmatpush1.msra.mxu0 0.0
        %433 = vmatprep.subr.mxu0 0.0
        %434 = vmatpush1.msra.mxu0 0.0
        %435 = vmatprep.subr.mxu0 0.0
        %436 = vmatpush1.msra.mxu0 0.0
        %437 = vmatprep.subr.mxu0 0.0
        %438 = vmatpush1.msra.mxu0 0.0
        %439 = vmatprep.subr.mxu0 0.0
        %440 = vmatpush1.msra.mxu0 0.0
        %441 = vmatprep.subr.mxu0 0.0
        %442 = vmatpush1.msra.mxu0 0.0
        %443 = vmatprep.subr.mxu0 0.0
        %444 = vmatpush1.msra.mxu0 0.0
        %445 = vmatprep.subr.mxu0 0.0
        %446 = vmatpush1.msra.mxu0 0.0
        %447 = vmatprep.subr.mxu0 0.0
        %448 = vmatpush1.msra.mxu0 0.0
        %449 = vmatprep.subr.mxu0 0.0
        %450 = vmatpush1.msra.mxu0 0.0
        %451 = vmatprep.subr.mxu0 0.0
        %452 = vmatpush1.msra.mxu0 0.0
        %453 = vmatprep.subr.mxu0 0.0
        %454 = vmatpush1.msra.mxu0 0.0
        %455 = vmatprep.subr.mxu0 0.0
        %456 = vmatpush1.msra.mxu0 0.0
        %457 = vmatprep.subr.mxu0 0.0
        %458 = vmatpush1.msra.mxu0 %v402
        %459 = vmatprep.subr.mxu0 0.0
        %460 = vmatpush1.msra.mxu0 %v401
        %461 = vmatprep.subr.mxu0 0.0
        %462 = vmatpush1.msra.mxu0 %v400
        %463 = vmatprep.subr.mxu0 0.0
        %464 = vmatpush2.msra.mxu0 0.0
        %465 = vmatprep.subr.mxu0 0.0
        %466 = vmatpush2.msra.mxu0 0.0
        %467 = vmatprep.subr.mxu0 0.0
        %468 = vmatpush2.msra.mxu0 0.0
        %469 = vmatprep.subr.mxu0 0.0
        %470 = vmatpush2.msra.mxu0 0.0
        %471 = vmatprep.subr.mxu0 0.0
        %472 = vmatpush2.msra.mxu0 0.0
        %473 = vmatprep.subr.mxu0 0.0
        %474 = vmatpush2.msra.mxu0 0.0
        %475 = vmatprep.subr.mxu0 0.0
        %476 = vmatpush2.msra.mxu0 0.0
        %477 = vmatprep.subr.mxu0 0.0
        %478 = vmatpush2.msra.mxu0 0.0
        %479 = vmatprep.subr.mxu0 0.0
        %480 = vmatpush2.msra.mxu0 0.0
        %481 = vmatprep.subr.mxu0 0.0
        %482 = vmatpush2.msra.mxu0 0.0
        %483 = vmatprep.subr.mxu0 0.0
        %484 = vmatpush2.msra.mxu0 0.0
        %485 = vmatprep.subr.mxu0 0.0
        %486 = vmatpush2.msra.mxu0 0.0
        %487 = vmatprep.subr.mxu0 0.0
        %488 = vmatpush2.msra.mxu0 0.0
        %489 = vmatprep.subr.mxu0 0.0
        %490 = vmatpush2.msra.mxu0 0.0
        %491 = vmatprep.subr.mxu0 0.0
        %492 = vmatpush2.msra.mxu0 0.0
        %493 = vmatprep.subr.mxu0 0.0
        %494 = vmatpush2.msra.mxu0 0.0
        %495 = vmatprep.mubr.f32.mxu0 0.0
        %496 = vmatmul.mubr.f32.gmra.mxu0 %v423
        %v497 = vpop.f32.mrf.mxu0
        %v498 = vadd.f32 %v409, %v497
        %v499 = vpop.f32.mrf.mxu0
        %500 = vmatprep.mubr.f32.mxu0 0.0
        %501 = vmatmul.mubr.f32.gmra.mxu0 %v426
        %v502 = vpop.f32.mrf.mxu0
        %v503 = vadd.f32 %v414, %v502
        %v504 = vpop.f32.mrf.mxu0
        %505 = vmatprep.mubr.f32.mxu0 0.0
        %506 = vmatmul.mubr.f32.gmra.mxu0 %v429
        %v507 = vpop.f32.mrf.mxu0
        %v508 = vadd.f32 %v419, %v507
        %v509 = vpop.f32.mrf.mxu0
        %510 = vdwg.mxu0
        %511 = vst [vmem:[%s389] sm:$0xff] %v498
        %512 = vst [vmem:[%s389 + $0x8] sm:$0xff] %v503
        %513 = vst [vmem:[%s389 + $0x10] sm:$0xff] %v508
        %v514 = vld [vmem:[#allocation5] sm:$0xff]
        %v515 = vld [vmem:[#allocation5 + $0x8] sm:$0xff]
        %v516 = vld [vmem:[#allocation5 + $0x10] sm:$0xff]
        %v517 = vld [vmem:[%s357] sm:$0xff]
        %v518 = vld [vmem:[%s357 + $0x8] sm:$0xff]
        %v519 = vld [vmem:[%s357 + $0x10] sm:$0xff]
        %v520 = vld [vmem:[%s3] sm:$0xff]
        %v521 = vld [vmem:[%s3 + $0x8] sm:$0xff]
        %v522 = vld [vmem:[%s3 + $0x10] sm:$0xff]
        %524 = vset.pattern.permute.xlu0 0
        %525 = vperm.xlu0 %524, %v520
        %v526 = vpop.permute.xlu0 %525
        %529 = vset.pattern.permute.xlu0 0
        %530 = vperm.xlu0 %529, %v521
        %v531 = vpop.permute.xlu0 %530
        %534 = vset.pattern.permute.xlu0 0
        %535 = vperm.xlu0 %534, %v522
        %v536 = vpop.permute.xlu0 %535
        %v539 = vsel %vm421, %v514, 0
        %v542 = vsel %vm421, %v515, 0
        %v545 = vsel %vm421, %v516, 0
        %547 = vmatprep.subr.mxu0 0.0
        %548 = vmatpush1.msra.mxu0 0.0
        %549 = vmatprep.subr.mxu0 0.0
        %550 = vmatpush1.msra.mxu0 0.0
        %551 = vmatprep.subr.mxu0 0.0
        %552 = vmatpush1.msra.mxu0 0.0
        %553 = vmatprep.subr.mxu0 0.0
        %554 = vmatpush1.msra.mxu0 0.0
        %555 = vmatprep.subr.mxu0 0.0
        %556 = vmatpush1.msra.mxu0 0.0
        %557 = vmatprep.subr.mxu0 0.0
        %558 = vmatpush1.msra.mxu0 0.0
        %559 = vmatprep.subr.mxu0 0.0
        %560 = vmatpush1.msra.mxu0 0.0
        %561 = vmatprep.subr.mxu0 0.0
        %562 = vmatpush1.msra.mxu0 0.0
        %563 = vmatprep.subr.mxu0 0.0
        %564 = vmatpush1.msra.mxu0 0.0
        %565 = vmatprep.subr.mxu0 0.0
        %566 = vmatpush1.msra.mxu0 0.0
        %567 = vmatprep.subr.mxu0 0.0
        %568 = vmatpush1.msra.mxu0 0.0
        %569 = vmatprep.subr.mxu0 0.0
        %570 = vmatpush1.msra.mxu0 0.0
        %571 = vmatprep.subr.mxu0 0.0
        %572 = vmatpush1.msra.mxu0 0.0
        %573 = vmatprep.subr.mxu0 0.0
        %574 = vmatpush1.msra.mxu0 %v519
        %575 = vmatprep.subr.mxu0 0.0
        %576 = vmatpush1.msra.mxu0 %v518
        %577 = vmatprep.subr.mxu0 0.0
        %578 = vmatpush1.msra.mxu0 %v517
        %579 = vmatprep.subr.mxu0 0.0
        %580 = vmatpush2.msra.mxu0 0.0
        %581 = vmatprep.subr.mxu0 0.0
        %582 = vmatpush2.msra.mxu0 0.0
        %583 = vmatprep.subr.mxu0 0.0
        %584 = vmatpush2.msra.mxu0 0.0
        %585 = vmatprep.subr.mxu0 0.0
        %586 = vmatpush2.msra.mxu0 0.0
        %587 = vmatprep.subr.mxu0 0.0
        %588 = vmatpush2.msra.mxu0 0.0
        %589 = vmatprep.subr.mxu0 0.0
        %590 = vmatpush2.msra.mxu0 0.0
        %591 = vmatprep.subr.mxu0 0.0
        %592 = vmatpush2.msra.mxu0 0.0
        %593 = vmatprep.subr.mxu0 0.0
        %594 = vmatpush2.msra.mxu0 0.0
        %595 = vmatprep.subr.mxu0 0.0
        %596 = vmatpush2.msra.mxu0 0.0
        %597 = vmatprep.subr.mxu0 0.0
        %598 = vmatpush2.msra.mxu0 0.0
        %599 = vmatprep.subr.mxu0 0.0
        %600 = vmatpush2.msra.mxu0 0.0
        %601 = vmatprep.subr.mxu0 0.0
        %602 = vmatpush2.msra.mxu0 0.0
        %603 = vmatprep.subr.mxu0 0.0
        %604 = vmatpush2.msra.mxu0 0.0
        %605 = vmatprep.subr.mxu0 0.0
        %606 = vmatpush2.msra.mxu0 0.0
        %607 = vmatprep.subr.mxu0 0.0
        %608 = vmatpush2.msra.mxu0 0.0
        %609 = vmatprep.subr.mxu0 0.0
        %610 = vmatpush2.msra.mxu0 0.0
        %611 = vmatprep.mubr.f32.mxu0 0.0
        %612 = vmatmul.mubr.f32.gmra.mxu0 %v539
        %v613 = vpop.f32.mrf.mxu0
        %v614 = vadd.f32 %v526, %v613
        %v615 = vpop.f32.mrf.mxu0
        %616 = vmatprep.mubr.f32.mxu0 0.0
        %617 = vmatmul.mubr.f32.gmra.mxu0 %v542
        %v618 = vpop.f32.mrf.mxu0
        %v619 = vadd.f32 %v531, %v618
        %v620 = vpop.f32.mrf.mxu0
        %621 = vmatprep.mubr.f32.mxu0 0.0
        %622 = vmatmul.mubr.f32.gmra.mxu0 %v545
        %v623 = vpop.f32.mrf.mxu0
        %v624 = vadd.f32 %v536, %v623
        %v625 = vpop.f32.mrf.mxu0
        %626 = vdwg.mxu0
        %627 = vst [vmem:[%s396] sm:$0xff] %v614
        %628 = vst [vmem:[%s396 + $0x8] sm:$0xff] %v619
        %629 = vst [vmem:[%s396 + $0x10] sm:$0xff] %v624
        %s630 = sand.u32 %s171, 1
        %s631 = scalar_lea.sflag [#allocation4], %s630
        %s632 = sand.u32 %s171, 1
        %s633 = smul.addr %s632, 24
        %s634 = scalar_lea.vmem [#allocation9], %s633
        %s635 = sand.u32 %s197, 1
        %s636 = scalar_lea.sflag [#allocation11], %s635
        %s637 = sand.u32 %s197, 1
        %s638 = smul.addr %s637, 24
        %s639 = scalar_lea.vmem [#allocation10], %s638
        // Predicated region
        $region95: #{tpu_custom_call.1} parent=77 // pred_check
          %p640 = pneg %p181
        $region96: #{tpu_custom_call.1} parent=77 // pred_check_branch
          %642 = sbr.rel (%p640) target = $region98
        $region97: #{tpu_custom_call.1} parent=77 // pred_region
          %s644 = ssub.s32 384, 384
          %645 = vsyncadd %s631, %s644
          %s646 = smul.addr %s27, 128
          %s647 = scalar_lea.hbm %s6, %s646
          %s648 = sshll.u32 %s634, 4
          %s649 = int_to_ptr.vmem [resolvable:$true] %s648
          %654 = dma.vmem_to_hbm [thread:$0]  %s649, 384, %s647, %s631, 128, 256, 8
        $region98: #{tpu_custom_call.1} parent=77 // pred_fallthru
          _
        // Predicated region
        $region99: #{tpu_custom_call.1} parent=77 // pred_check
          %p655 = pneg %p207
        $region100: #{tpu_custom_call.1} parent=77 // pred_check_branch
          %657 = sbr.rel (%p655) target = $region102
        $region101: #{tpu_custom_call.1} parent=77 // pred_region
          %s659 = ssub.s32 384, 384
          %660 = vsyncadd %s636, %s659
          %s661 = smul.addr %s27, 128
          %s662 = scalar_lea.hbm %s7, %s661
          %s663 = sshll.u32 %s639, 4
          %s664 = int_to_ptr.vmem [resolvable:$true] %s663
          %669 = dma.vmem_to_hbm [thread:$0]  %s664, 384, %s662, %s636, 128, 256, 8
        $region102: #{tpu_custom_call.1} parent=77 // pred_fallthru
          _
      $region78: #{tpu_custom_call.1} parent=5 // pred_fallthru
        _
      %p670 = scmp.le.s32.totalorder 2, %s22
      // Predicated region
      $region103: #{tpu_custom_call.1} parent=5 // pred_check
        %p671 = pneg %p670
      $region104: #{tpu_custom_call.1} parent=5 // pred_check_branch
        %673 = sbr.rel (%p671) target = $region106
      $region105: #{tpu_custom_call.1} parent=5 // pred_region
        %s674 = ssub.s32 %s22, 2
        // Predicated region
        $region107: #{tpu_custom_call.1} parent=105 // pred_check
          %p675 = pneg %p187
        $region108: #{tpu_custom_call.1} parent=105 // pred_check_branch
          %677 = sbr.rel (%p675) target = $region110
        $region109: #{tpu_custom_call.1} parent=105 // pred_region
          %s678 = sand.u32 %s172, 1
          %s679 = scalar_lea.sflag [#allocation4], %s678
          %s680 = sand.u32 %s172, 1
          %s681 = smul.addr %s680, 24
          %s682 = scalar_lea.vmem [#allocation9], %s681
          %683 = dma.done %s679, 384
        $region110: #{tpu_custom_call.1} parent=105 // pred_fallthru
          _
        // Predicated region
        $region111: #{tpu_custom_call.1} parent=105 // pred_check
          %p684 = pneg %p213
        $region112: #{tpu_custom_call.1} parent=105 // pred_check_branch
          %686 = sbr.rel (%p684) target = $region114
        $region113: #{tpu_custom_call.1} parent=105 // pred_region
          %s687 = sand.u32 %s198, 1
          %s688 = scalar_lea.sflag [#allocation11], %s687
          %s689 = sand.u32 %s198, 1
          %s690 = smul.addr %s689, 24
          %s691 = scalar_lea.vmem [#allocation10], %s690
          %692 = dma.done %s688, 384
        $region114: #{tpu_custom_call.1} parent=105 // pred_fallthru
          _
      $region106: #{tpu_custom_call.1} parent=5 // pred_fallthru
        _
    $region6: #{tpu_custom_call.1} parent=1 // loop_footer
      %s26 = sadd.s32 1, %s22
    $region7: #{tpu_custom_call.1} parent=1 // loop_footer_branch
      %21 = sbr.rel target = $region3
    $region8: #{tpu_custom_call.1} parent=1 // loop_exit
      _
    %693 = vsyncpa [#allocation3], 1
    %s694 = scalar_lea.sflag [#allocation3], 1
    %695 = vsyncpa %s694, 1
    %696 = vsyncpa [#allocation6], 1
    %697 = vsyncpa [#allocation4], 1
    %s698 = scalar_lea.sflag [#allocation4], 1
    %699 = vsyncpa %s698, 1
    %700 = vsyncpa [#allocation11], 1
    %s701 = scalar_lea.sflag [#allocation11], 1
    %702 = vsyncpa %s701, 1

</llo_original>
